<compile_context>
chip_gen: v5e
topology: v5e:2x2
jax: 0.10.0
libtpu: 0.0.40
codegen_flags: <defaults>
</compile_context>

<pallas_src>
import functools

import jax
import jax.numpy as jnp
from jax.experimental import pallas as pl
from jax.experimental.pallas import tpu as pltpu

ATOM_PAD = 128  # each distributional head padded to a full 128-lane group


def _round_up(x, m):
    return ((x + m - 1) // m) * m


def c51_duel_kernel(x_ref, w1_ref, b1_ref, w2_ref, b2_ref,
                    wh_ref, bh_ref, wo_ref, bo_ref, out_ref,
                    *, n_actions, atom_pad):
    # Matmul inputs are bf16; accumulation, biases and softmax are f32.
    x = x_ref[...]

    # ---- base stream: depth=2 [Linear + ReLU] ----
    h = jnp.maximum(
        jnp.dot(x, w1_ref[...], preferred_element_type=jnp.float32) + b1_ref[...], 0.0)
    h = jnp.maximum(
        jnp.dot(h.astype(jnp.bfloat16), w2_ref[...],
                preferred_element_type=jnp.float32) + b2_ref[...], 0.0)

    # ---- fused V/A hidden layer: [hv | ha] in one matmul ----
    hva = jnp.maximum(
        jnp.dot(h.astype(jnp.bfloat16), wh_ref[...],
                preferred_element_type=jnp.float32) + bh_ref[...], 0.0)

    # ---- fused output heads: 128-lane group a = Q_a = V + A_a - mean(A) ----
    # Padded lanes (n_atoms..127) carry a -1e30 f32 bias -> exp underflows to exactly 0.
    q_all = jnp.dot(hva.astype(jnp.bfloat16), wo_ref[...],
                    preferred_element_type=jnp.float32) + bo_ref[...]

    for a in range(n_actions):  # tiny static unroll; 128-lane-aligned static slices
        lo = a * atom_pad
        q = q_all[:, lo:lo + atom_pad]
        m = jnp.max(q, axis=-1, keepdims=True)
        e = jnp.exp(q - m)
        inv = pl.reciprocal(jnp.sum(e, axis=-1, keepdims=True))  # exact: sum stays 1
        out_ref[:, lo:lo + atom_pad] = (e * inv).astype(out_ref.dtype)


def build_fused_params(params):
    """Wrapper-side weight fusion + bf16 cast (no in-kernel cost)."""
    width = params["wv1"].shape[0]
    n_actions, _, n_atoms = params["wa2"].shape
    assert n_atoms <= ATOM_PAD

    # fused V/A hidden layer: h -> [hv | ha]
    wh = jnp.concatenate([params["wv1"], params["wa1"]], axis=1)   # (w, 2w)
    bh = jnp.concatenate([params["bv1"], params["ba1"]], axis=1)   # (1, 2w)

    wa2 = params["wa2"]                                            # (A, w, atoms)
    ba2 = params["ba2"]                                            # (A, atoms)
    wa2_mean = jnp.mean(wa2, axis=0)                               # (w, atoms)
    ba2_mean = jnp.mean(ba2, axis=0)                               # (atoms,)

    # fused output heads: group a = V + A_a - mean(A)
    wo = jnp.zeros((2 * width, n_actions * ATOM_PAD), jnp.float32)
    bo = jnp.zeros((1, n_actions * ATOM_PAD), jnp.float32)
    for a in range(n_actions):
        c0 = a * ATOM_PAD
        wo = wo.at[:width, c0:c0 + n_atoms].set(params["wv2"])          # V (acts on hv)
        wo = wo.at[width:, c0:c0 + n_atoms].set(wa2[a] - wa2_mean)      # A_a - mean(A)
        bo = bo.at[0, c0:c0 + n_atoms].set(params["bv2"][0] + ba2[a] - ba2_mean)
        bo = bo.at[0, c0 + n_atoms:c0 + ATOM_PAD].set(-1e30)            # kill pad lanes

    bf16 = jnp.bfloat16
    return dict(w1=params["w1"].astype(bf16), b1=params["b1"],
                w2=params["w2"].astype(bf16), b2=params["b2"],
                wh=wh.astype(bf16), bh=bh,
                wo=wo.astype(bf16), bo=bo,   # biases stay f32 (keeps -1e30 mask exact)
                n_actions=n_actions, n_atoms=n_atoms)


def c51_duel_forward(state, fused, *, b_tile_max=1024, out_dtype=jnp.float32):
    """state: (B, in_dims) f32 -> Q: (B, n_actions, n_atoms) softmax over atoms."""
    n_actions = fused["n_actions"]
    n_atoms = fused["n_atoms"]
    batch, in_dims = state.shape

    # --- batch tiling: big tiles (<= b_tile_max), minimal padding, and >= 2 (even)
    #     grid steps when the batch is large enough so "parallel" shards over v7x's TCs.
    b8 = _round_up(batch, 8)
    if b8 <= b_tile_max:
        num_tiles = 2 if b8 >= 512 else 1
    else:
        num_tiles = pl.cdiv(b8, b_tile_max)
        if num_tiles > 1 and num_tiles % 2:
            num_tiles += 1
    b_tile = _round_up(pl.cdiv(b8, num_tiles), 8)
    padded_b = b_tile * num_tiles

    x = state.astype(jnp.bfloat16)
    if padded_b != batch:
        x = jnp.pad(x, ((0, padded_b - batch), (0, 0)))

    out_cols = n_actions * ATOM_PAD
    weight_args = (fused["w1"], fused["b1"], fused["w2"], fused["b2"],
                   fused["wh"], fused["bh"], fused["wo"], fused["bo"])

    def full_spec(arr):
        return pl.BlockSpec(arr.shape, lambda i: (0,) * arr.ndim)

    in_specs = [pl.BlockSpec((b_tile, in_dims), lambda i: (i, 0))]
    in_specs += [full_spec(w) for w in weight_args]
    out_spec = pl.BlockSpec((b_tile, out_cols), lambda i: (i, 0))

    width = fused["w1"].shape[1]
    flops = 2 * padded_b * (in_dims * width + width * width
                            + width * (2 * width) + (2 * width) * out_cols)
    transcendentals = padded_b * out_cols  # exp per output lane (+ cheap reciprocal)
    bytes_accessed = (x.size * x.dtype.itemsize
                      + padded_b * out_cols * jnp.dtype(out_dtype).itemsize
                      + sum(int(w.size) * w.dtype.itemsize for w in weight_args))

    kernel = functools.partial(c51_duel_kernel, n_actions=n_actions, atom_pad=ATOM_PAD)

    out = pl.pallas_call(
        kernel,
        out_shape=jax.ShapeDtypeStruct((padded_b, out_cols), out_dtype),
        grid_spec=pltpu.PrefetchScalarGridSpec(
            num_scalar_prefetch=0,
            grid=(num_tiles,),
            in_specs=in_specs,
            out_specs=out_spec,
        ),
        compiler_params=pltpu.CompilerParams(
            dimension_semantics=("parallel",)),
        cost_estimate=pl.CostEstimate(
            flops=flops,
            transcendentals=transcendentals,
            bytes_accessed=bytes_accessed),
    )(x, *weight_args)

    # Glue: unpad batch, split heads, drop padded atom lanes -> (B, n_actions, n_atoms).
    # (A fused consumer could instead read the lane-dense padded (B, A, 128) layout.)
    q = out[:batch].reshape(batch, n_actions, ATOM_PAD)[:, :, :n_atoms]
    return q


def init_params(key, in_dims, width, n_actions, n_atoms):
    """Deterministic PyTorch-Linear-style init: U(-1/sqrt(fan_in), 1/sqrt(fan_in))."""
    def lin(k, fan_in, fan_out):
        kw, kb = jax.random.split(k)
        bound = 1.0 / jnp.sqrt(fan_in)
        w = jax.random.uniform(kw, (fan_in, fan_out), jnp.float32, -bound, bound)
        b = jax.random.uniform(kb, (1, fan_out), jnp.float32, -bound, bound)
        return w, b

    ks = jax.random.split(key, 6)
    w1, b1 = lin(ks[0], in_dims, width)
    w2, b2 = lin(ks[1], width, width)
    wv1, bv1 = lin(ks[2], width, width)
    wv2, bv2 = lin(ks[3], width, n_atoms)
    wa1, ba1 = lin(ks[4], width, width)
    wa2_flat, ba2_flat = lin(ks[5], width, n_actions * n_atoms)

    # per-action A-head slices, same layout as the PyTorch .view(-1, A, atoms)
    wa2 = jnp.transpose(wa2_flat.reshape(width, n_actions, n_atoms), (1, 0, 2))
    ba2 = ba2_flat.reshape(n_actions, n_atoms)

    params = dict(w1=w1, b1=b1, w2=w2, b2=b2,
                  wv1=wv1, bv1=bv1, wv2=wv2, bv2=bv2,
                  wa1=wa1, ba1=ba1, wa2=wa2, ba2=ba2)
    return params, (wa2_flat, ba2_flat)


def reference_forward(state, params, wa2_flat, ba2_flat, n_actions, n_atoms):
    """Pure-JAX f32 reference mirroring the PyTorch forward exactly."""
    relu = jax.nn.relu
    h = relu(state @ params["w1"] + params["b1"])
    h = relu(h @ params["w2"] + params["b2"])
    V = (relu(h @ params["wv1"] + params["bv1"]) @ params["wv2"] + params["bv2"])
    A = (relu(h @ params["wa1"] + params["ba1"]) @ wa2_flat + ba2_flat)
    V = V.reshape(-1, 1, n_atoms)
    A = A.reshape(-1, n_actions, n_atoms)
    Q = V + A - A.mean(axis=1, keepdims=True)
    return jax.nn.softmax(Q, axis=-1)


if __name__ == "__main__":
    # small shapes consistent with the module: input_dims=(16,), depth=2, width=32
    batch, in_dims, width = 8, 16, 32
    n_actions, n_atoms = 4, 51

    key = jax.random.PRNGKey(0)
    k_par, k_x = jax.random.split(key)
    params, (wa2_flat, ba2_flat) = init_params(k_par, in_dims, width, n_actions, n_atoms)
    fused = build_fused_params(params)
    state = jax.random.normal(k_x, (batch, in_dims), dtype=jnp.float32)

    q = c51_duel_forward(state, fused)
    q = jax.block_until_ready(q)

    q_ref = reference_forward(state, params, wa2_flat, ba2_flat, n_actions, n_atoms)
    assert q.shape == (batch, n_actions, n_atoms)

    # bf16 matmul inputs (f32 accumulation) vs f32 reference -> relaxed elementwise tol.
    max_err = float(jnp.max(jnp.abs(q - q_ref)))
    assert max_err < 5e-3, max_err
    # exact-reciprocal softmax in f32: every atom distribution is normalized.
    assert jnp.allclose(jnp.sum(q, axis=-1), 1.0, atol=1e-4)

    print("KERNEL_OK")
</pallas_src>

<mosaic_0001>
module attributes {stable_mosaic.version = 11 : i64} {
  func.func @c51_duel_kernel(%arg0: i32, %arg1: memref<8x16xbf16, #tpu.memory_space<vmem>>, %arg2: memref<16x32xbf16, #tpu.memory_space<vmem>>, %arg3: memref<1x32xf32, #tpu.memory_space<vmem>>, %arg4: memref<32x32xbf16, #tpu.memory_space<vmem>>, %arg5: memref<1x32xf32, #tpu.memory_space<vmem>>, %arg6: memref<32x64xbf16, #tpu.memory_space<vmem>>, %arg7: memref<1x64xf32, #tpu.memory_space<vmem>>, %arg8: memref<64x512xbf16, #tpu.memory_space<vmem>>, %arg9: memref<1x512xf32, #tpu.memory_space<vmem>>, %arg10: memref<8x512xf32, #tpu.memory_space<vmem>>) attributes {dimension_semantics = [#tpu.dimension_semantics<parallel>], iteration_bounds = array<i64: 1>, scalar_prefetch = 0 : i64, scratch_operands = 0 : i64, tpu.core_type = #tpu.core_type<tc>, window_params = [{transform_indices = @transform_0, window_bounds = array<i64: 8, 16>}, {pipeline_mode = #tpu.pipeline_mode<synchronous>, transform_indices = @transform_1, window_bounds = array<i64: 16, 32>}, {pipeline_mode = #tpu.pipeline_mode<synchronous>, transform_indices = @transform_2, window_bounds = array<i64: 1, 32>}, {pipeline_mode = #tpu.pipeline_mode<synchronous>, transform_indices = @transform_3, window_bounds = array<i64: 32, 32>}, {pipeline_mode = #tpu.pipeline_mode<synchronous>, transform_indices = @transform_4, window_bounds = array<i64: 1, 32>}, {pipeline_mode = #tpu.pipeline_mode<synchronous>, transform_indices = @transform_5, window_bounds = array<i64: 32, 64>}, {pipeline_mode = #tpu.pipeline_mode<synchronous>, transform_indices = @transform_6, window_bounds = array<i64: 1, 64>}, {pipeline_mode = #tpu.pipeline_mode<synchronous>, transform_indices = @transform_7, window_bounds = array<i64: 64, 512>}, {pipeline_mode = #tpu.pipeline_mode<synchronous>, transform_indices = @transform_8, window_bounds = array<i64: 1, 512>}, {transform_indices = @transform_9, window_bounds = array<i64: 8, 512>}]} {
    %c0 = arith.constant 0 : index
    %c0_0 = arith.constant 0 : index
    %0 = vector.load %arg1[%c0, %c0_0] : memref<8x16xbf16, #tpu.memory_space<vmem>>, vector<8x16xbf16>
    %c0_1 = arith.constant 0 : index
    %c0_2 = arith.constant 0 : index
    %1 = vector.load %arg2[%c0_1, %c0_2] : memref<16x32xbf16, #tpu.memory_space<vmem>>, vector<16x32xbf16>
    %cst = arith.constant dense<0.000000e+00> : vector<8x32xf32>
    %2 = tpu.matmul %0, %1, %cst {dimension_numbers = #tpu.dot_dimension_numbers<[1], [0], [0], [1], [0, 0, 1, 1], [], []>} : vector<8x16xbf16>, vector<16x32xbf16>, vector<8x32xf32> -> vector<8x32xf32>
    %c0_3 = arith.constant 0 : index
    %c0_4 = arith.constant 0 : index
    %3 = vector.load %arg3[%c0_3, %c0_4] : memref<1x32xf32, #tpu.memory_space<vmem>>, vector<1x32xf32>
    %4 = vector.broadcast %3 : vector<1x32xf32> to vector<8x32xf32>
    %5 = arith.addf %2, %4 : vector<8x32xf32>
    %cst_5 = arith.constant 0.000000e+00 : f32
    %6 = vector.broadcast %cst_5 : f32 to vector<8x32xf32>
    %7 = arith.maximumf %5, %6 : vector<8x32xf32>
    %8 = arith.truncf %7 : vector<8x32xf32> to vector<8x32xbf16>
    %c0_6 = arith.constant 0 : index
    %c0_7 = arith.constant 0 : index
    %9 = vector.load %arg4[%c0_6, %c0_7] : memref<32x32xbf16, #tpu.memory_space<vmem>>, vector<32x32xbf16>
    %cst_8 = arith.constant dense<0.000000e+00> : vector<8x32xf32>
    %10 = tpu.matmul %8, %9, %cst_8 {dimension_numbers = #tpu.dot_dimension_numbers<[1], [0], [0], [1], [0, 0, 1, 1], [], []>} : vector<8x32xbf16>, vector<32x32xbf16>, vector<8x32xf32> -> vector<8x32xf32>
    %c0_9 = arith.constant 0 : index
    %c0_10 = arith.constant 0 : index
    %11 = vector.load %arg5[%c0_9, %c0_10] : memref<1x32xf32, #tpu.memory_space<vmem>>, vector<1x32xf32>
    %12 = vector.broadcast %11 : vector<1x32xf32> to vector<8x32xf32>
    %13 = arith.addf %10, %12 : vector<8x32xf32>
    %cst_11 = arith.constant 0.000000e+00 : f32
    %14 = vector.broadcast %cst_11 : f32 to vector<8x32xf32>
    %15 = arith.maximumf %13, %14 : vector<8x32xf32>
    %16 = arith.truncf %15 : vector<8x32xf32> to vector<8x32xbf16>
    %c0_12 = arith.constant 0 : index
    %c0_13 = arith.constant 0 : index
    %17 = vector.load %arg6[%c0_12, %c0_13] : memref<32x64xbf16, #tpu.memory_space<vmem>>, vector<32x64xbf16>
    %cst_14 = arith.constant dense<0.000000e+00> : vector<8x64xf32>
    %18 = tpu.matmul %16, %17, %cst_14 {dimension_numbers = #tpu.dot_dimension_numbers<[1], [0], [0], [1], [0, 0, 1, 1], [], []>} : vector<8x32xbf16>, vector<32x64xbf16>, vector<8x64xf32> -> vector<8x64xf32>
    %c0_15 = arith.constant 0 : index
    %c0_16 = arith.constant 0 : index
    %19 = vector.load %arg7[%c0_15, %c0_16] : memref<1x64xf32, #tpu.memory_space<vmem>>, vector<1x64xf32>
    %20 = vector.broadcast %19 : vector<1x64xf32> to vector<8x64xf32>
    %21 = arith.addf %18, %20 : vector<8x64xf32>
    %cst_17 = arith.constant 0.000000e+00 : f32
    %22 = vector.broadcast %cst_17 : f32 to vector<8x64xf32>
    %23 = arith.maximumf %21, %22 : vector<8x64xf32>
    %24 = arith.truncf %23 : vector<8x64xf32> to vector<8x64xbf16>
    %c0_18 = arith.constant 0 : index
    %c0_19 = arith.constant 0 : index
    %25 = vector.load %arg8[%c0_18, %c0_19] : memref<64x512xbf16, #tpu.memory_space<vmem>>, vector<64x512xbf16>
    %cst_20 = arith.constant dense<0.000000e+00> : vector<8x512xf32>
    %26 = tpu.matmul %24, %25, %cst_20 {dimension_numbers = #tpu.dot_dimension_numbers<[1], [0], [0], [1], [0, 0, 1, 1], [], []>} : vector<8x64xbf16>, vector<64x512xbf16>, vector<8x512xf32> -> vector<8x512xf32>
    %c0_21 = arith.constant 0 : index
    %c0_22 = arith.constant 0 : index
    %27 = vector.load %arg9[%c0_21, %c0_22] : memref<1x512xf32, #tpu.memory_space<vmem>>, vector<1x512xf32>
    %28 = vector.broadcast %27 : vector<1x512xf32> to vector<8x512xf32>
    %29 = arith.addf %26, %28 : vector<8x512xf32>
    %30 = vector.extract_strided_slice %29 {offsets = [0, 0], sizes = [8, 128], strides = [1, 1]} : vector<8x512xf32> to vector<8x128xf32>
    %cst_23 = arith.constant dense<0xFF800000> : vector<8xf32>
    %31 = vector.multi_reduction <maximumf>, %30, %cst_23 [1] : vector<8x128xf32> to vector<8xf32>
    %32 = vector.shape_cast %31 : vector<8xf32> to vector<8x1xf32>
    %33 = vector.broadcast %32 : vector<8x1xf32> to vector<8x128xf32>
    %34 = arith.subf %30, %33 : vector<8x128xf32>
    %35 = math.exp %34 : vector<8x128xf32>
    %cst_24 = arith.constant dense<0.000000e+00> : vector<8xf32>
    %36 = vector.multi_reduction <add>, %35, %cst_24 [1] : vector<8x128xf32> to vector<8xf32>
    %37 = vector.shape_cast %36 : vector<8xf32> to vector<8x1xf32>
    %38 = tpu.reciprocal %37 : vector<8x1xf32> -> vector<8x1xf32>
    %39 = vector.broadcast %38 : vector<8x1xf32> to vector<8x128xf32>
    %40 = arith.mulf %35, %39 : vector<8x128xf32>
    %c0_25 = arith.constant 0 : index
    %c0_26 = arith.constant 0 : index
    %41 = vector.load %arg10[%c0_25, %c0_26] : memref<8x512xf32, #tpu.memory_space<vmem>>, vector<8x128xf32>
    tpu.vector_store %arg10[%c0_25, %c0_26], %40 {strides = array<i32>} : memref<8x512xf32, #tpu.memory_space<vmem>>, vector<8x128xf32>,
    %42 = vector.extract_strided_slice %29 {offsets = [0, 128], sizes = [8, 128], strides = [1, 1]} : vector<8x512xf32> to vector<8x128xf32>
    %cst_27 = arith.constant dense<0xFF800000> : vector<8xf32>
    %43 = vector.multi_reduction <maximumf>, %42, %cst_27 [1] : vector<8x128xf32> to vector<8xf32>
    %44 = vector.shape_cast %43 : vector<8xf32> to vector<8x1xf32>
    %45 = vector.broadcast %44 : vector<8x1xf32> to vector<8x128xf32>
    %46 = arith.subf %42, %45 : vector<8x128xf32>
    %47 = math.exp %46 : vector<8x128xf32>
    %cst_28 = arith.constant dense<0.000000e+00> : vector<8xf32>
    %48 = vector.multi_reduction <add>, %47, %cst_28 [1] : vector<8x128xf32> to vector<8xf32>
    %49 = vector.shape_cast %48 : vector<8xf32> to vector<8x1xf32>
    %50 = tpu.reciprocal %49 : vector<8x1xf32> -> vector<8x1xf32>
    %51 = vector.broadcast %50 : vector<8x1xf32> to vector<8x128xf32>
    %52 = arith.mulf %47, %51 : vector<8x128xf32>
    %c0_29 = arith.constant 0 : index
    %c128 = arith.constant 128 : index
    %53 = vector.load %arg10[%c0_29, %c128] : memref<8x512xf32, #tpu.memory_space<vmem>>, vector<8x128xf32>
    tpu.vector_store %arg10[%c0_29, %c128], %52 {strides = array<i32>} : memref<8x512xf32, #tpu.memory_space<vmem>>, vector<8x128xf32>,
    %54 = vector.extract_strided_slice %29 {offsets = [0, 256], sizes = [8, 128], strides = [1, 1]} : vector<8x512xf32> to vector<8x128xf32>
    %cst_30 = arith.constant dense<0xFF800000> : vector<8xf32>
    %55 = vector.multi_reduction <maximumf>, %54, %cst_30 [1] : vector<8x128xf32> to vector<8xf32>
    %56 = vector.shape_cast %55 : vector<8xf32> to vector<8x1xf32>
    %57 = vector.broadcast %56 : vector<8x1xf32> to vector<8x128xf32>
    %58 = arith.subf %54, %57 : vector<8x128xf32>
    %59 = math.exp %58 : vector<8x128xf32>
    %cst_31 = arith.constant dense<0.000000e+00> : vector<8xf32>
    %60 = vector.multi_reduction <add>, %59, %cst_31 [1] : vector<8x128xf32> to vector<8xf32>
    %61 = vector.shape_cast %60 : vector<8xf32> to vector<8x1xf32>
    %62 = tpu.reciprocal %61 : vector<8x1xf32> -> vector<8x1xf32>
    %63 = vector.broadcast %62 : vector<8x1xf32> to vector<8x128xf32>
    %64 = arith.mulf %59, %63 : vector<8x128xf32>
    %c0_32 = arith.constant 0 : index
    %c256 = arith.constant 256 : index
    %65 = vector.load %arg10[%c0_32, %c256] : memref<8x512xf32, #tpu.memory_space<vmem>>, vector<8x128xf32>
    tpu.vector_store %arg10[%c0_32, %c256], %64 {strides = array<i32>} : memref<8x512xf32, #tpu.memory_space<vmem>>, vector<8x128xf32>,
    %66 = vector.extract_strided_slice %29 {offsets = [0, 384], sizes = [8, 128], strides = [1, 1]} : vector<8x512xf32> to vector<8x128xf32>
    %cst_33 = arith.constant dense<0xFF800000> : vector<8xf32>
    %67 = vector.multi_reduction <maximumf>, %66, %cst_33 [1] : vector<8x128xf32> to vector<8xf32>
    %68 = vector.shape_cast %67 : vector<8xf32> to vector<8x1xf32>
    %69 = vector.broadcast %68 : vector<8x1xf32> to vector<8x128xf32>
    %70 = arith.subf %66, %69 : vector<8x128xf32>
    %71 = math.exp %70 : vector<8x128xf32>
    %cst_34 = arith.constant dense<0.000000e+00> : vector<8xf32>
    %72 = vector.multi_reduction <add>, %71, %cst_34 [1] : vector<8x128xf32> to vector<8xf32>
    %73 = vector.shape_cast %72 : vector<8xf32> to vector<8x1xf32>
    %74 = tpu.reciprocal %73 : vector<8x1xf32> -> vector<8x1xf32>
    %75 = vector.broadcast %74 : vector<8x1xf32> to vector<8x128xf32>
    %76 = arith.mulf %71, %75 : vector<8x128xf32>
    %c0_35 = arith.constant 0 : index
    %c384 = arith.constant 384 : index
    %77 = vector.load %arg10[%c0_35, %c384] : memref<8x512xf32, #tpu.memory_space<vmem>>, vector<8x128xf32>
    tpu.vector_store %arg10[%c0_35, %c384], %76 {strides = array<i32>} : memref<8x512xf32, #tpu.memory_space<vmem>>, vector<8x128xf32>,
    return
  }
  func.func @transform_0(%arg0: i32) -> (i32, i32) {
    %c0_i32 = arith.constant 0 : i32
    %c0_i32_0 = arith.constant 0 : i32
    return %arg0, %c0_i32 : i32, i32
  }
  func.func @transform_1(%arg0: i32) -> (i32, i32) {
    %c0_i32 = arith.constant 0 : i32
    %c0_i32_0 = arith.constant 0 : i32
    %c0_i32_1 = arith.constant 0 : i32
    return %c0_i32, %c0_i32_0 : i32, i32
  }
  func.func @transform_2(%arg0: i32) -> (i32, i32) {
    %c0_i32 = arith.constant 0 : i32
    %c0_i32_0 = arith.constant 0 : i32
    %c0_i32_1 = arith.constant 0 : i32
    return %c0_i32, %c0_i32_0 : i32, i32
  }
  func.func @transform_3(%arg0: i32) -> (i32, i32) {
    %c0_i32 = arith.constant 0 : i32
    %c0_i32_0 = arith.constant 0 : i32
    %c0_i32_1 = arith.constant 0 : i32
    return %c0_i32, %c0_i32_0 : i32, i32
  }
  func.func @transform_4(%arg0: i32) -> (i32, i32) {
    %c0_i32 = arith.constant 0 : i32
    %c0_i32_0 = arith.constant 0 : i32
    %c0_i32_1 = arith.constant 0 : i32
    return %c0_i32, %c0_i32_0 : i32, i32
  }
  func.func @transform_5(%arg0: i32) -> (i32, i32) {
    %c0_i32 = arith.constant 0 : i32
    %c0_i32_0 = arith.constant 0 : i32
    %c0_i32_1 = arith.constant 0 : i32
    return %c0_i32, %c0_i32_0 : i32, i32
  }
  func.func @transform_6(%arg0: i32) -> (i32, i32) {
    %c0_i32 = arith.constant 0 : i32
    %c0_i32_0 = arith.constant 0 : i32
    %c0_i32_1 = arith.constant 0 : i32
    return %c0_i32, %c0_i32_0 : i32, i32
  }
  func.func @transform_7(%arg0: i32) -> (i32, i32) {
    %c0_i32 = arith.constant 0 : i32
    %c0_i32_0 = arith.constant 0 : i32
    %c0_i32_1 = arith.constant 0 : i32
    return %c0_i32, %c0_i32_0 : i32, i32
  }
  func.func @transform_8(%arg0: i32) -> (i32, i32) {
    %c0_i32 = arith.constant 0 : i32
    %c0_i32_0 = arith.constant 0 : i32
    %c0_i32_1 = arith.constant 0 : i32
    return %c0_i32, %c0_i32_0 : i32, i32
  }
  func.func @transform_9(%arg0: i32) -> (i32, i32) {
    %c0_i32 = arith.constant 0 : i32
    %c0_i32_0 = arith.constant 0 : i32
    return %arg0, %c0_i32 : i32, i32
  }
}

</mosaic_0001>

<llo_original>
// kernel: tpu_custom_call.1
$region0: #{tpu_custom_call.1}
  #allocation0 [shape = 'u32[]', space=smem, size = 0x4, offset = 0x4, fixed_abs, tag = 'smem constant byte address 0x4 - core index']
  #allocation1 [shape = 'u32[72,128]{1,0:T(1,128)}', space=vmem, size = 0x9000, scoped, tag = 'internal scratch']
  %s0 = inlined_call_operand.hbm [shape: bf16[8,16], index: 0, kind: input, shape index: {}]
  %s1 = inlined_call_operand.hbm [shape: bf16[16,32], index: 1, kind: input, shape index: {}]
  %s2 = inlined_call_operand.vmem [shape: f32[1,32], index: 2, kind: input, shape index: {}]
  %s3 = inlined_call_operand.hbm [shape: bf16[32,32], index: 3, kind: input, shape index: {}]
  %s4 = inlined_call_operand.vmem [shape: f32[1,32], index: 4, kind: input, shape index: {}]
  %s5 = inlined_call_operand.hbm [shape: bf16[32,64], index: 5, kind: input, shape index: {}]
  %s6 = inlined_call_operand.vmem [shape: f32[1,64], index: 6, kind: input, shape index: {}]
  %s7 = inlined_call_operand.hbm [shape: bf16[64,512], index: 7, kind: input, shape index: {}]
  %s8 = inlined_call_operand.vmem [shape: f32[1,512], index: 8, kind: input, shape index: {}]
  %s9 = inlined_call_operand.hbm [shape: f32[8,512], index: 9, kind: output, shape index: {}]
  %s10 = sld [smem:[#allocation0]]
  $region66: #{tpu_custom_call.1} parent=0
    _
  %s12 = ssub.s32 1, %s10
  %s13 = scalar_select 0, %s12, %s10
  $region1: #{tpu_custom_call.1} parent=0
    #allocation2 [shape = 'u8[2048]{0}', space=vmem, size = 0x800, scoped, tag = 'input window, operand 0, single buffered']
    #allocation3 [shape = 's32[1]{0}', space=sflag, size = 0x4, scoped, tag = 'scoped memory for tpu_custom_call.1']
    #allocation4 [shape = 's32[1]{0}', space=sflag, size = 0x4, scoped, tag = 'scoped memory for tpu_custom_call.1']
    #allocation5 [shape = 'u8[4096]{0}', space=vmem, size = 0x1000, scoped, tag = 'input window, operand 1, single buffered']
    #allocation6 [shape = 's32[1]{0}', space=sflag, size = 0x4, scoped, tag = 'scoped memory for tpu_custom_call.1']
    #allocation7 [shape = 'u8[8192]{0}', space=vmem, size = 0x2000, scoped, tag = 'input window, operand 3, single buffered']
    #allocation8 [shape = 'u8[8192]{0}', space=vmem, size = 0x2000, scoped, tag = 'input window, operand 5, single buffered']
    #allocation9 [shape = 's32[1]{0}', space=sflag, size = 0x4, scoped, tag = 'scoped memory for tpu_custom_call.1']
    #allocation10 [shape = 'u8[65536]{0}', space=vmem, size = 0x10000, scoped, tag = 'input window, operand 7, single buffered']
    #allocation11 [shape = 'u8[16384]{0}', space=vmem, size = 0x4000, scoped, tag = 'output window, operand 0, single buffered']
    %14 = vsyncpa [#allocation3], 0
    %15 = vsyncpa [#allocation6], 0
    %16 = vsyncpa [#allocation9], 0
    %17 = vsyncpa [#allocation4], 0
    // Predicated region
    $region2: #{tpu_custom_call.1} parent=1 // pred_check
      _
    $region3: #{tpu_custom_call.1} parent=1 // pred_check_branch
      %19 = sbr.rel (0) target = $region5
    $region4: #{tpu_custom_call.1} parent=1 // pred_region
      %21 = vsyncadd [#allocation3], 0
      %s23 = sshll.u32 %s0, 4
      %s24 = int_to_ptr.hbm [resolvable:$true] %s23
      %s25 = sshll.u32 [#allocation2], 4
      %s26 = int_to_ptr.vmem [resolvable:$true] %s25
      %28 = dma.hbm_to_vmem [thread:$0]  %s24, 64, %s26, [#allocation3]
    $region5: #{tpu_custom_call.1} parent=1 // pred_fallthru
      _
    // Predicated region
    $region6: #{tpu_custom_call.1} parent=1 // pred_check
      _
    $region7: #{tpu_custom_call.1} parent=1 // pred_check_branch
      %30 = sbr.rel (0) target = $region9
    $region8: #{tpu_custom_call.1} parent=1 // pred_region
      %32 = vsyncadd [#allocation6], 0
      %s33 = sshll.u32 %s1, 4
      %s34 = int_to_ptr.hbm [resolvable:$true] %s33
      %s35 = sshll.u32 [#allocation5], 4
      %s36 = int_to_ptr.vmem [resolvable:$true] %s35
      %41 = dma.hbm_to_vmem [thread:$0]  %s34, 128, %s36, [#allocation6], 64, 64, 4
    $region9: #{tpu_custom_call.1} parent=1 // pred_fallthru
      _
    // Predicated region
    $region10: #{tpu_custom_call.1} parent=1 // pred_check
      _
    $region11: #{tpu_custom_call.1} parent=1 // pred_check_branch
      %43 = sbr.rel (0) target = $region13
    $region12: #{tpu_custom_call.1} parent=1 // pred_region
      _
    $region13: #{tpu_custom_call.1} parent=1 // pred_fallthru
      _
    // Predicated region
    $region14: #{tpu_custom_call.1} parent=1 // pred_check
      _
    $region15: #{tpu_custom_call.1} parent=1 // pred_check_branch
      %45 = sbr.rel (0) target = $region17
    $region16: #{tpu_custom_call.1} parent=1 // pred_region
      %47 = vsyncadd [#allocation6], 0
      %s48 = sshll.u32 %s3, 4
      %s49 = int_to_ptr.hbm [resolvable:$true] %s48
      %s50 = sshll.u32 [#allocation7], 4
      %s51 = int_to_ptr.vmem [resolvable:$true] %s50
      %56 = dma.hbm_to_vmem [thread:$0]  %s49, 256, %s51, [#allocation6], 64, 64, 4
    $region17: #{tpu_custom_call.1} parent=1 // pred_fallthru
      _
    // Predicated region
    $region18: #{tpu_custom_call.1} parent=1 // pred_check
      _
    $region19: #{tpu_custom_call.1} parent=1 // pred_check_branch
      %58 = sbr.rel (0) target = $region21
    $region20: #{tpu_custom_call.1} parent=1 // pred_region
      _
    $region21: #{tpu_custom_call.1} parent=1 // pred_fallthru
      _
    // Predicated region
    $region22: #{tpu_custom_call.1} parent=1 // pred_check
      _
    $region23: #{tpu_custom_call.1} parent=1 // pred_check_branch
      %60 = sbr.rel (0) target = $region25
    $region24: #{tpu_custom_call.1} parent=1 // pred_region
      %62 = vsyncadd [#allocation9], 0
      %s63 = sshll.u32 %s5, 4
      %s64 = int_to_ptr.hbm [resolvable:$true] %s63
      %s65 = sshll.u32 [#allocation8], 4
      %s66 = int_to_ptr.vmem [resolvable:$true] %s65
      %71 = dma.hbm_to_vmem [thread:$0]  %s64, 256, %s66, [#allocation9], 64, 64, 4
    $region25: #{tpu_custom_call.1} parent=1 // pred_fallthru
      _
    // Predicated region
    $region26: #{tpu_custom_call.1} parent=1 // pred_check
      _
    $region27: #{tpu_custom_call.1} parent=1 // pred_check_branch
      %73 = sbr.rel (0) target = $region29
    $region28: #{tpu_custom_call.1} parent=1 // pred_region
      _
    $region29: #{tpu_custom_call.1} parent=1 // pred_fallthru
      _
    // Predicated region
    $region30: #{tpu_custom_call.1} parent=1 // pred_check
      _
    $region31: #{tpu_custom_call.1} parent=1 // pred_check_branch
      %75 = sbr.rel (0) target = $region33
    $region32: #{tpu_custom_call.1} parent=1 // pred_region
      %77 = vsyncadd [#allocation9], 0
      %s78 = sshll.u32 %s7, 4
      %s79 = int_to_ptr.hbm [resolvable:$true] %s78
      %s80 = sshll.u32 [#allocation10], 4
      %s81 = int_to_ptr.vmem [resolvable:$true] %s80
      %86 = dma.hbm_to_vmem [thread:$0]  %s79, 2048, %s81, [#allocation9], 256, 256, 16
    $region33: #{tpu_custom_call.1} parent=1 // pred_fallthru
      _
    // Predicated region
    $region34: #{tpu_custom_call.1} parent=1 // pred_check
      _
    $region35: #{tpu_custom_call.1} parent=1 // pred_check_branch
      %88 = sbr.rel (0) target = $region37
    $region36: #{tpu_custom_call.1} parent=1 // pred_region
      _
    $region37: #{tpu_custom_call.1} parent=1 // pred_fallthru
      _
    // Predicated region
    $region38: #{tpu_custom_call.1} parent=1 // pred_check
      _
    $region39: #{tpu_custom_call.1} parent=1 // pred_check_branch
      %90 = sbr.rel (0) target = $region41
    $region40: #{tpu_custom_call.1} parent=1 // pred_region
      %92 = dma.done [#allocation3], 64
    $region41: #{tpu_custom_call.1} parent=1 // pred_fallthru
      _
    // Predicated region
    $region42: #{tpu_custom_call.1} parent=1 // pred_check
      _
    $region43: #{tpu_custom_call.1} parent=1 // pred_check_branch
      %94 = sbr.rel (0) target = $region45
    $region44: #{tpu_custom_call.1} parent=1 // pred_region
      %96 = dma.done [#allocation6], 128
    $region45: #{tpu_custom_call.1} parent=1 // pred_fallthru
      _
    // Predicated region
    $region46: #{tpu_custom_call.1} parent=1 // pred_check
      _
    $region47: #{tpu_custom_call.1} parent=1 // pred_check_branch
      %98 = sbr.rel (0) target = $region49
    $region48: #{tpu_custom_call.1} parent=1 // pred_region
      %100 = dma.done [#allocation6], 256
    $region49: #{tpu_custom_call.1} parent=1 // pred_fallthru
      _
    // Predicated region
    $region50: #{tpu_custom_call.1} parent=1 // pred_check
      _
    $region51: #{tpu_custom_call.1} parent=1 // pred_check_branch
      %102 = sbr.rel (0) target = $region53
    $region52: #{tpu_custom_call.1} parent=1 // pred_region
      %104 = dma.done [#allocation9], 256
    $region53: #{tpu_custom_call.1} parent=1 // pred_fallthru
      _
    // Predicated region
    $region54: #{tpu_custom_call.1} parent=1 // pred_check
      _
    $region55: #{tpu_custom_call.1} parent=1 // pred_check_branch
      %106 = sbr.rel (0) target = $region57
    $region56: #{tpu_custom_call.1} parent=1 // pred_region
      %108 = dma.done [#allocation9], 2048
    $region57: #{tpu_custom_call.1} parent=1 // pred_fallthru
      _
    %v110 = vld [vmem:[#allocation2] sm:$0xf]
    %v111 = vld [vmem:[#allocation5] sm:$0xf]
    %v112 = vld [vmem:[#allocation5 + $0x4] sm:$0xf]
    %v113 = vld [vmem:[%s2] sm:$0x1]
    %v115 = vperm.slane %v113, 0
    %v119 = vunpack.c.l.b16 %v111
    %v120 = vunpack.c.l.b16 %v112
    %v121 = vpack.c.b16 %v120, %v119
    %vm123 = vcmask 130048
    %v125 = vsel %vm123, %v110, 0
    %127 = vmatpush.bf16.msra.mxu0 0
    %128 = vmatpush.bf16.msra.mxu0 0
    %129 = vmatpush.bf16.msra.mxu0 0
    %130 = vmatpush.bf16.msra.mxu0 0
    %131 = vmatpush.bf16.msra.mxu0 0
    %132 = vmatpush.bf16.msra.mxu0 0
    %133 = vmatpush.bf16.msra.mxu0 0
    %134 = vmatpush.bf16.msra.mxu0 %v121
    %135 = vmatmul.bf16.gmra.mxu0 %v125
    %v136 = vpop.f32.mrf.mxu0
    %v137 = vadd.f32 %v115, %v136
    %v138 = vpop.f32.mrf.mxu0
    %139 = vdwg.mxu0
    %v140 = vmax.f32 %v137, 0.0
    %v141 = vpack.c.bf16 %v140, %v140
    %v142 = vld [vmem:[#allocation7] sm:$0xf]
    %v143 = vld [vmem:[#allocation7 + $0x4] sm:$0xf]
    %v144 = vld [vmem:[#allocation7 + $0x8] sm:$0xf]
    %v145 = vld [vmem:[#allocation7 + $0xc] sm:$0xf]
    %v146 = vld [vmem:[%s4] sm:$0x1]
    %v148 = vperm.slane %v146, 0
    %v154 = vunpack.c.l.b16 %v142
    %v155 = vunpack.c.l.b16 %v143
    %v156 = vunpack.c.l.b16 %v144
    %v157 = vunpack.c.l.b16 %v145
    %v158 = vpack.c.b16 %v155, %v154
    %v159 = vpack.c.b16 %v157, %v156
    %vm162 = vcmask 261120
    %v164 = vsel %vm162, %v141, 0
    %166 = vmatpush.bf16.msra.mxu0 0
    %167 = vmatpush.bf16.msra.mxu0 0
    %168 = vmatpush.bf16.msra.mxu0 0
    %169 = vmatpush.bf16.msra.mxu0 0
    %170 = vmatpush.bf16.msra.mxu0 0
    %171 = vmatpush.bf16.msra.mxu0 0
    %172 = vmatpush.bf16.msra.mxu0 %v159
    %173 = vmatpush.bf16.msra.mxu0 %v158
    %174 = vmatmul.bf16.gmra.mxu0 %v164
    %v175 = vpop.f32.mrf.mxu0
    %v176 = vadd.f32 %v148, %v175
    %v177 = vpop.f32.mrf.mxu0
    %178 = vdwg.mxu0
    %v179 = vmax.f32 %v176, 0.0
    %v180 = vpack.c.bf16 %v179, %v179
    %v181 = vld [vmem:[#allocation8] sm:$0xf]
    %v182 = vld [vmem:[#allocation8 + $0x4] sm:$0xf]
    %v183 = vld [vmem:[#allocation8 + $0x8] sm:$0xf]
    %v184 = vld [vmem:[#allocation8 + $0xc] sm:$0xf]
    %v185 = vld [vmem:[%s6] sm:$0x1]
    %v187 = vperm.slane %v185, 0
    %v193 = vunpack.c.l.b16 %v181
    %v194 = vunpack.c.l.b16 %v182
    %v195 = vunpack.c.l.b16 %v183
    %v196 = vunpack.c.l.b16 %v184
    %v197 = vpack.c.b16 %v194, %v193
    %v198 = vpack.c.b16 %v196, %v195
    %v202 = vsel %vm162, %v180, 0
    %204 = vmatpush.bf16.msra.mxu0 0
    %205 = vmatpush.bf16.msra.mxu0 0
    %206 = vmatpush.bf16.msra.mxu0 0
    %207 = vmatpush.bf16.msra.mxu0 0
    %208 = vmatpush.bf16.msra.mxu0 0
    %209 = vmatpush.bf16.msra.mxu0 0
    %210 = vmatpush.bf16.msra.mxu0 %v198
    %211 = vmatpush.bf16.msra.mxu0 %v197
    %212 = vmatmul.bf16.gmra.mxu0 %v202
    %v213 = vpop.f32.mrf.mxu0
    %v214 = vadd.f32 %v187, %v213
    %v215 = vpop.f32.mrf.mxu0
    %216 = vdwg.mxu0
    %v217 = vmax.f32 %v214, 0.0
    %v218 = vpack.c.bf16 %v217, %v217
    %v219 = vld [vmem:[#allocation10] sm:$0xff]
    %v220 = vld [vmem:[#allocation10 + $0x8] sm:$0xff]
    %v221 = vld [vmem:[#allocation10 + $0x10] sm:$0xff]
    %v222 = vld [vmem:[#allocation10 + $0x18] sm:$0xff]
    %v223 = vld [vmem:[#allocation10 + $0x20] sm:$0xff]
    %v224 = vld [vmem:[#allocation10 + $0x28] sm:$0xff]
    %v225 = vld [vmem:[#allocation10 + $0x30] sm:$0xff]
    %v226 = vld [vmem:[#allocation10 + $0x38] sm:$0xff]
    %v227 = vld [vmem:[#allocation10 + $0x40] sm:$0xff]
    %v228 = vld [vmem:[#allocation10 + $0x48] sm:$0xff]
    %v229 = vld [vmem:[#allocation10 + $0x50] sm:$0xff]
    %v230 = vld [vmem:[#allocation10 + $0x58] sm:$0xff]
    %v231 = vld [vmem:[#allocation10 + $0x60] sm:$0xff]
    %v232 = vld [vmem:[#allocation10 + $0x68] sm:$0xff]
    %v233 = vld [vmem:[#allocation10 + $0x70] sm:$0xff]
    %v234 = vld [vmem:[#allocation10 + $0x78] sm:$0xff]
    %v235 = vld [vmem:[%s8] sm:$0xf]
    %v237 = vperm.slane %v235, 0
    %v238 = vperm.slane %v235, 1
    %v239 = vperm.slane %v235, 2
    %v240 = vperm.slane %v235, 3
    %v261 = vunpack.c.l.b16 %v219
    %v262 = vunpack.c.h.b16 %v219
    %v263 = vunpack.c.l.b16 %v220
    %v264 = vunpack.c.h.b16 %v220
    %v265 = vunpack.c.l.b16 %v221
    %v266 = vunpack.c.h.b16 %v221
    %v267 = vunpack.c.l.b16 %v222
    %v268 = vunpack.c.h.b16 %v222
    %v269 = vunpack.c.l.b16 %v223
    %v270 = vunpack.c.h.b16 %v223
    %v271 = vunpack.c.l.b16 %v224
    %v272 = vunpack.c.h.b16 %v224
    %v273 = vunpack.c.l.b16 %v225
    %v274 = vunpack.c.h.b16 %v225
    %v275 = vunpack.c.l.b16 %v226
    %v276 = vunpack.c.h.b16 %v226
    %v277 = vunpack.c.l.b16 %v227
    %v278 = vunpack.c.h.b16 %v227
    %v279 = vunpack.c.l.b16 %v228
    %v280 = vunpack.c.h.b16 %v228
    %v281 = vunpack.c.l.b16 %v229
    %v282 = vunpack.c.h.b16 %v229
    %v283 = vunpack.c.l.b16 %v230
    %v284 = vunpack.c.h.b16 %v230
    %v285 = vunpack.c.l.b16 %v231
    %v286 = vunpack.c.h.b16 %v231
    %v287 = vunpack.c.l.b16 %v232
    %v288 = vunpack.c.h.b16 %v232
    %v289 = vunpack.c.l.b16 %v233
    %v290 = vunpack.c.h.b16 %v233
    %v291 = vunpack.c.l.b16 %v234
    %v292 = vunpack.c.h.b16 %v234
    %v293 = vpack.c.b16 %v265, %v261
    %v294 = vpack.c.b16 %v266, %v262
    %v295 = vpack.c.b16 %v267, %v263
    %v296 = vpack.c.b16 %v268, %v264
    %v297 = vpack.c.b16 %v273, %v269
    %v298 = vpack.c.b16 %v274, %v270
    %v299 = vpack.c.b16 %v275, %v271
    %v300 = vpack.c.b16 %v276, %v272
    %v301 = vpack.c.b16 %v281, %v277
    %v302 = vpack.c.b16 %v282, %v278
    %v303 = vpack.c.b16 %v283, %v279
    %v304 = vpack.c.b16 %v284, %v280
    %v305 = vpack.c.b16 %v289, %v285
    %v306 = vpack.c.b16 %v290, %v286
    %v307 = vpack.c.b16 %v291, %v287
    %v308 = vpack.c.b16 %v292, %v288
    %vm325 = vcmask 523264
    %v327 = vsel %vm325, %v218, 0
    %329 = vmatpush.bf16.msra.mxu0 0
    %330 = vmatpush.bf16.msra.mxu0 0
    %331 = vmatpush.bf16.msra.mxu0 0
    %332 = vmatpush.bf16.msra.mxu0 0
    %333 = vmatpush.bf16.msra.mxu0 %v305
    %334 = vmatpush.bf16.msra.mxu0 %v301
    %335 = vmatpush.bf16.msra.mxu0 %v297
    %336 = vmatpush.bf16.msra.mxu0 %v293
    %337 = vmatmul.bf16.gmra.mxu0 %v327
    %v338 = vpop.f32.mrf.mxu0
    %v339 = vadd.f32 %v237, %v338
    %v340 = vpop.f32.mrf.mxu0
    %341 = vdwg.mxu0
    %342 = vmatpush.bf16.msra.mxu0 0
    %343 = vmatpush.bf16.msra.mxu0 0
    %344 = vmatpush.bf16.msra.mxu0 0
    %345 = vmatpush.bf16.msra.mxu0 0
    %346 = vmatpush.bf16.msra.mxu0 %v306
    %347 = vmatpush.bf16.msra.mxu0 %v302
    %348 = vmatpush.bf16.msra.mxu0 %v298
    %349 = vmatpush.bf16.msra.mxu0 %v294
    %350 = vmatmul.bf16.gmra.mxu0 %v327
    %v351 = vpop.f32.mrf.mxu0
    %v352 = vadd.f32 %v238, %v351
    %v353 = vpop.f32.mrf.mxu0
    %354 = vdwg.mxu0
    %355 = vmatpush.bf16.msra.mxu0 0
    %356 = vmatpush.bf16.msra.mxu0 0
    %357 = vmatpush.bf16.msra.mxu0 0
    %358 = vmatpush.bf16.msra.mxu0 0
    %359 = vmatpush.bf16.msra.mxu0 %v307
    %360 = vmatpush.bf16.msra.mxu0 %v303
    %361 = vmatpush.bf16.msra.mxu0 %v299
    %362 = vmatpush.bf16.msra.mxu0 %v295
    %363 = vmatmul.bf16.gmra.mxu0 %v327
    %v364 = vpop.f32.mrf.mxu0
    %v365 = vadd.f32 %v239, %v364
    %v366 = vpop.f32.mrf.mxu0
    %367 = vdwg.mxu0
    %368 = vmatpush.bf16.msra.mxu0 0
    %369 = vmatpush.bf16.msra.mxu0 0
    %370 = vmatpush.bf16.msra.mxu0 0
    %371 = vmatpush.bf16.msra.mxu0 0
    %372 = vmatpush.bf16.msra.mxu0 %v308
    %373 = vmatpush.bf16.msra.mxu0 %v304
    %374 = vmatpush.bf16.msra.mxu0 %v300
    %375 = vmatpush.bf16.msra.mxu0 %v296
    %376 = vmatmul.bf16.gmra.mxu0 %v327
    %v377 = vpop.f32.mrf.mxu0
    %v378 = vadd.f32 %v240, %v377
    %v379 = vpop.f32.mrf.mxu0
    %380 = vdwg.mxu0
    %381 = vmax.xlane.f32.xlu0 %v339
    %v382 = vpop.xlane.xlu0 %381
    %v383 = vsub.f32 %v339, %v382
    %v384 = vmul.f32 %v383, 1.442695
    %v385 = vpow.pop %v384
    %386 = vadd.xlane.f32.xlu0 %v385
    %v387 = vpop.xlane.xlu0 %386
    %v388 = vrcp.pop %v387
    %v389 = vmul.f32 %v387, %v388
    %v390 = vsub.f32 1.0, %v389
    %v391 = vmul.f32 %v388, %v390
    %v392 = vadd.f32 %v388, %v391
    %vm393 = vweird.f32 %v387
    %vm394 = vweird.f32 %v388
    %vm395 = vmor %vm393, %vm394
    %v396 = vsel %vm395, %v388, %v392
    %v397 = vand.u32 2147483647, %v387
    %vm398 = vcmp.eq.f32.partialorder %v397, 8.507059e+37
    %v399 = vand.u32 %v387, 2147483648
    %v400 = vor.u32 1.1754944e-38, %v399
    %v401 = vsel %vm398, %v400, %v396
    %v402 = vmul.f32 %v385, %v401
    %403 = vst [vmem:[#allocation11] sm:$0xff] %v402
    %404 = vmax.xlane.f32.xlu0 %v352
    %v405 = vpop.xlane.xlu0 %404
    %v406 = vsub.f32 %v352, %v405
    %v407 = vmul.f32 %v406, 1.442695
    %v408 = vpow.pop %v407
    %409 = vadd.xlane.f32.xlu0 %v408
    %v410 = vpop.xlane.xlu0 %409
    %v411 = vrcp.pop %v410
    %v412 = vmul.f32 %v410, %v411
    %v413 = vsub.f32 1.0, %v412
    %v414 = vmul.f32 %v411, %v413
    %v415 = vadd.f32 %v411, %v414
    %vm416 = vweird.f32 %v410
    %vm417 = vweird.f32 %v411
    %vm418 = vmor %vm416, %vm417
    %v419 = vsel %vm418, %v411, %v415
    %v420 = vand.u32 2147483647, %v410
    %vm421 = vcmp.eq.f32.partialorder %v420, 8.507059e+37
    %v422 = vand.u32 %v410, 2147483648
    %v423 = vor.u32 1.1754944e-38, %v422
    %v424 = vsel %vm421, %v423, %v419
    %v425 = vmul.f32 %v408, %v424
    %426 = vst [vmem:[#allocation11 + $0x8] sm:$0xff] %v425
    %427 = vmax.xlane.f32.xlu0 %v365
    %v428 = vpop.xlane.xlu0 %427
    %v429 = vsub.f32 %v365, %v428
    %v430 = vmul.f32 %v429, 1.442695
    %v431 = vpow.pop %v430
    %432 = vadd.xlane.f32.xlu0 %v431
    %v433 = vpop.xlane.xlu0 %432
    %v434 = vrcp.pop %v433
    %v435 = vmul.f32 %v433, %v434
    %v436 = vsub.f32 1.0, %v435
    %v437 = vmul.f32 %v434, %v436
    %v438 = vadd.f32 %v434, %v437
    %vm439 = vweird.f32 %v433
    %vm440 = vweird.f32 %v434
    %vm441 = vmor %vm439, %vm440
    %v442 = vsel %vm441, %v434, %v438
    %v443 = vand.u32 2147483647, %v433
    %vm444 = vcmp.eq.f32.partialorder %v443, 8.507059e+37
    %v445 = vand.u32 %v433, 2147483648
    %v446 = vor.u32 1.1754944e-38, %v445
    %v447 = vsel %vm444, %v446, %v442
    %v448 = vmul.f32 %v431, %v447
    %449 = vst [vmem:[#allocation11 + $0x10] sm:$0xff] %v448
    %450 = vmax.xlane.f32.xlu0 %v378
    %v451 = vpop.xlane.xlu0 %450
    %v452 = vsub.f32 %v378, %v451
    %v453 = vmul.f32 %v452, 1.442695
    %v454 = vpow.pop %v453
    %455 = vadd.xlane.f32.xlu0 %v454
    %v456 = vpop.xlane.xlu0 %455
    %v457 = vrcp.pop %v456
    %v458 = vmul.f32 %v456, %v457
    %v459 = vsub.f32 1.0, %v458
    %v460 = vmul.f32 %v457, %v459
    %v461 = vadd.f32 %v457, %v460
    %vm462 = vweird.f32 %v456
    %vm463 = vweird.f32 %v457
    %vm464 = vmor %vm462, %vm463
    %v465 = vsel %vm464, %v457, %v461
    %v466 = vand.u32 2147483647, %v456
    %vm467 = vcmp.eq.f32.partialorder %v466, 8.507059e+37
    %v468 = vand.u32 %v456, 2147483648
    %v469 = vor.u32 1.1754944e-38, %v468
    %v470 = vsel %vm467, %v469, %v465
    %v471 = vmul.f32 %v454, %v470
    %472 = vst [vmem:[#allocation11 + $0x18] sm:$0xff] %v471
    // Predicated region
    $region58: #{tpu_custom_call.1} parent=1 // pred_check
      _
    $region59: #{tpu_custom_call.1} parent=1 // pred_check_branch
      %474 = sbr.rel (0) target = $region61
    $region60: #{tpu_custom_call.1} parent=1 // pred_region
      %476 = vsyncadd [#allocation4], 0
      %s478 = sshll.u32 [#allocation11], 4
      %s479 = int_to_ptr.vmem [resolvable:$true] %s478
      %s480 = sshll.u32 %s9, 4
      %s481 = int_to_ptr.hbm [resolvable:$true] %s480
      %483 = dma.vmem_to_hbm [thread:$0]  %s479, 512, %s481, [#allocation4]
    $region61: #{tpu_custom_call.1} parent=1 // pred_fallthru
      _
    // Predicated region
    $region62: #{tpu_custom_call.1} parent=1 // pred_check
      _
    $region63: #{tpu_custom_call.1} parent=1 // pred_check_branch
      %485 = sbr.rel (0) target = $region65
    $region64: #{tpu_custom_call.1} parent=1 // pred_region
      %487 = dma.done [#allocation4], 512
    $region65: #{tpu_custom_call.1} parent=1 // pred_fallthru
      _
    %488 = vsyncpa [#allocation3], 1
    %489 = vsyncpa [#allocation6], 1
    %490 = vsyncpa [#allocation9], 1
    %491 = vsyncpa [#allocation4], 1

</llo_original>
